<compile_context>
chip_gen: v6e
topology: v6e:2x2x1
jax: 0.10.0
libtpu: 0.0.40
codegen_flags: <defaults>
</compile_context>

<pallas_src>
import numpy as np
import jax
import jax.numpy as jnp
from jax.experimental import pallas as pl
from jax.experimental.pallas import tpu as pltpu


# ----------------------------------------------------------------------------
# Pallas kernel: fused (3x3 conv + ReLU) -> 1x1 conv -> softmax -> drop dustbin
# ----------------------------------------------------------------------------
def _detector_head_kernel(cols_ref, w1_ref, b1_ref, w2_ref, b2_ref, out_ref):
    # cols_ref: (1, tm, 9*Cin)  bf16 im2col rows for tm spatial positions
    # w1_ref  : (9*Cin, Cmid)   bf16 fused 3x3 conv weight
    # b1_ref  : (1, Cmid)       f32
    # w2_ref  : (Cmid, Ncls)    bf16 1x1 conv weight
    # b2_ref  : (1, Ncls)       f32
    # out_ref : (1, tm, Ncls-1) f32 softmax probabilities, dustbin dropped
    ncls = w2_ref.shape[1]

    patch = cols_ref[0]                                     # (tm, 9*Cin) bf16

    # Single big MXU matmul for the whole 3x3 conv (K = 9*Cin).
    acc = jnp.dot(patch, w1_ref[...], preferred_element_type=jnp.float32)
    h = jnp.maximum(acc + b1_ref[0], 0.0)                   # f32 bias + ReLU (VPU)

    # 1x1 conv = matmul over channels (bf16 operands, f32 accumulate).
    logits = jnp.dot(h.astype(jnp.bfloat16), w2_ref[...],
                     preferred_element_type=jnp.float32) + b2_ref[0]  # (tm, Ncls)

    # Channel softmax (== dim=1 in the NCHW PyTorch code), numerically stable.
    m = jnp.max(logits, axis=-1, keepdims=True)
    e = jnp.exp(logits - m)                                 # EUP
    s = jnp.sum(e, axis=-1, keepdims=True)                  # sum over all 65 classes
    inv = pl.reciprocal(s, approx=True)                     # EUP slot, ~free
    # Only scale/store the 64 kept columns; dustbin column never materialized.
    out_ref[0] = e[:, :ncls - 1] * inv


def _pick_row_block(n_rows, max_rows=512):
    """Largest multiple-of-8 divisor of n_rows that is <= max_rows and leaves
    >= 2 grid steps (so Pallas can overlap DMA with compute). Falls back to a
    single full block if no such divisor exists."""
    best = None
    t = 8
    limit = min(n_rows // 2, max_rows)
    while t <= limit:
        if n_rows % t == 0:
            best = t
        t += 8
    return best if best is not None else n_rows


def detector_head_pallas(x_nchw, w1, b1, w2, b2):
    """SPHead (conv3x3+ReLU, conv1x1) + channel softmax + dustbin drop.

    x_nchw: (B, Cin, H, W) f32; weights in PyTorch layouts
      w1: (Cmid, Cin, 3, 3), b1: (Cmid,), w2: (Ncls, Cmid, 1, 1), b2: (Ncls,).
    Returns nodust probabilities in NHWC: (B, H, W, Ncls-1) f32."""
    B, Cin, H, W = x_nchw.shape
    Cmid = int(w1.shape[0])
    ncls = int(w2.shape[0])
    kin = 9 * Cin
    n_rows = H * W
    tm = _pick_row_block(n_rows)

    # --- glue (plain XLA, outside the kernel): layout, pad, im2col, repack ---
    x = jnp.transpose(x_nchw, (0, 2, 3, 1)).astype(jnp.float32)       # NHWC
    xpad = jnp.pad(x, ((0, 0), (1, 1), (1, 1), (0, 0)))               # conv3x3 pad=1
    # im2col: tap order (ky, kx, cin) matches the weight repack below.
    cols = jnp.concatenate(
        [xpad[:, ky:ky + H, kx:kx + W, :] for ky in range(3) for kx in range(3)],
        axis=-1)                                                      # (B, H, W, 9*Cin)
    cols = cols.reshape(B, n_rows, kin).astype(jnp.bfloat16)
    w1k = jnp.transpose(w1, (2, 3, 1, 0)).reshape(kin, Cmid).astype(jnp.bfloat16)
    w2k = jnp.transpose(w2.reshape(ncls, Cmid), (1, 0)).astype(jnp.bfloat16)
    b1k = b1.reshape(1, Cmid).astype(jnp.float32)
    b2k = b2.reshape(1, ncls).astype(jnp.float32)

    out = pl.pallas_call(
        _detector_head_kernel,
        out_shape=jax.ShapeDtypeStruct((B, n_rows, ncls - 1), jnp.float32),
        grid_spec=pltpu.PrefetchScalarGridSpec(
            num_scalar_prefetch=0,
            grid=(B, n_rows // tm),
            in_specs=[
                pl.BlockSpec((1, tm, kin), lambda b, r: (b, r, 0)),
                pl.BlockSpec((kin, Cmid), lambda b, r: (0, 0)),   # weights resident
                pl.BlockSpec((1, Cmid), lambda b, r: (0, 0)),
                pl.BlockSpec((Cmid, ncls), lambda b, r: (0, 0)),
                pl.BlockSpec((1, ncls), lambda b, r: (0, 0)),
            ],
            out_specs=pl.BlockSpec((1, tm, ncls - 1), lambda b, r: (b, r, 0)),
        ),
        compiler_params=pltpu.CompilerParams(
            dimension_semantics=("parallel", "parallel")),   # megacore-friendly (v7x)
    )(cols, w1k, b1k, w2k, b2k)
    return out.reshape(B, H, W, ncls - 1)


@jax.jit
def detector_heatmap(x_nchw, w1, b1, w2, b2):
    """Pallas head + pixel-shuffle to the full-resolution heatmap, one jit
    (no intermediate host sync, pixel-shuffle fused with the pallas_call)."""
    nodust = detector_head_pallas(x_nchw, w1, b1, w2, b2)   # (B, H, W, r*r)
    B, H, W, rr = nodust.shape
    r = int(round(np.sqrt(rr)))
    hm = nodust.reshape(B, H, W, r, r)                      # fix: (H, W), not (H, H)
    hm = jnp.transpose(hm, (0, 1, 3, 2, 4))                 # (B, H, r, W, r)
    return hm.reshape(B, H * r, W * r)


def _reference_head(x_nchw, w1, b1, w2, b2):
    """Independent pure-JAX reference (matches PyTorch Conv2d semantics)."""
    y = jax.lax.conv_general_dilated(
        x_nchw, w1, window_strides=(1, 1), padding="SAME",
        dimension_numbers=("NCHW", "OIHW", "NCHW"))
    y = jax.nn.relu(y + b1[None, :, None, None])
    z = jax.lax.conv_general_dilated(
        y, w2, window_strides=(1, 1), padding="SAME",
        dimension_numbers=("NCHW", "OIHW", "NCHW"))
    z = z + b2[None, :, None, None]
    dense = jax.nn.softmax(z, axis=1)
    nodust = dense[:, :-1]
    return jnp.transpose(nodust, (0, 2, 3, 1))              # NHWC


class SPDetector:
    """JAX/Pallas port of the PyTorch SPDetector module."""

    def __init__(self, in_channels, mid_channels, conf_thresh=0.015,
                 nms_dist=4, border_size=4, reduction=8, key=None):
        self.conf_thresh = conf_thresh
        self.nms_dist = nms_dist
        self.border_size = border_size
        self.reduction = reduction
        num_classes = reduction * reduction + 1

        key = jax.random.PRNGKey(0) if key is None else key
        k1, k2, k3, k4 = jax.random.split(key, 4)
        # Deterministic synthetic parameters (PyTorch weight layouts).
        fan1 = in_channels * 9
        self.w1 = jax.random.normal(k1, (mid_channels, in_channels, 3, 3),
                                    jnp.float32) / np.sqrt(fan1)
        self.b1 = 0.01 * jax.random.normal(k2, (mid_channels,), jnp.float32)
        self.w2 = jax.random.normal(k3, (num_classes, mid_channels, 1, 1),
                                    jnp.float32) / np.sqrt(mid_channels)
        self.b2 = 0.01 * jax.random.normal(k4, (num_classes,), jnp.float32)

    # Ported verbatim from the PyTorch module (pure numpy).
    def nms_fast(self, in_corners, H, W, dist_thresh):
        grid = np.zeros((H, W)).astype(int)
        inds = np.zeros((H, W)).astype(int)
        inds1 = np.argsort(-in_corners[2, :])
        corners = in_corners[:, inds1]
        rcorners = corners[:2, :].round().astype(int)
        if rcorners.shape[1] == 0:
            return (np.zeros((3, 0)).astype(int), np.zeros(0).astype(int))
        if rcorners.shape[1] == 1:
            out = np.vstack((rcorners, in_corners[2])).reshape(3, 1)
            return (out, np.zeros(1).astype(int))
        for i, rc in enumerate(rcorners.T):
            grid[rcorners[1, i], rcorners[0, i]] = 1
            inds[rcorners[1, i], rcorners[0, i]] = i
        pad = dist_thresh
        grid = np.pad(grid, ((pad, pad), (pad, pad)), mode='constant')
        count = 0
        for i, rc in enumerate(rcorners.T):
            pt = (rc[0] + pad, rc[1] + pad)
            if grid[pt[1], pt[0]] == 1:
                grid[pt[1] - pad:pt[1] + pad + 1, pt[0] - pad:pt[0] + pad + 1] = 0
                grid[pt[1], pt[0]] = -1
                count += 1
        keepy, keepx = np.where(grid == -1)
        keepy, keepx = (keepy - pad, keepx - pad)
        inds_keep = inds[keepy, keepx]
        out = corners[:, inds_keep]
        values = out[-1, :]
        inds2 = np.argsort(-values)
        out = out[:, inds2]
        out_inds = inds1[inds_keep[inds2]]
        return (out, out_inds)

    def forward(self, x):
        # x: (B, Cin, H, W) jnp array (NCHW, matching the PyTorch interface).
        x_height, x_width = int(x.shape[-2]), int(x.shape[-1])
        img_height = x_height * self.reduction
        img_width = x_width * self.reduction

        # Pallas head + pixel-shuffle fused into a single jitted device program.
        heatmap = detector_heatmap(x, self.w1, self.b1, self.w2, self.b2)

        # TODO(synk): torch.nonzero / masked_select outputs (pts1/pts2) are
        # computed but unused in the reference forward; not reproduced.
        # numpy post-processing (data-dependent shapes), as in the reference.
        heatmap = np.asarray(heatmap).squeeze()   # implicit device->host sync
        xs, ys = np.where(heatmap >= self.conf_thresh)
        if len(xs) == 0:
            return (np.zeros((3, 0)), None, None)
        pts = np.zeros((3, len(xs)))
        pts[0, :] = ys
        pts[1, :] = xs
        pts[2, :] = heatmap[xs, ys]
        pts, _ = self.nms_fast(pts, img_height, img_width, dist_thresh=self.nms_dist)
        inds = np.argsort(pts[2, :])
        pts = pts[:, inds[::-1]]
        bord = self.border_size
        toremoveW = np.logical_or(pts[0, :] < bord, pts[0, :] >= img_width - bord)
        toremoveH = np.logical_or(pts[1, :] < bord, pts[1, :] >= img_height - bord)
        toremove = np.logical_or(toremoveW, toremoveH)
        pts = pts[:, ~toremove]
        return pts


if __name__ == "__main__":
    key = jax.random.PRNGKey(0)
    k_param, k_x = jax.random.split(key)

    # Small demo shapes. Batch=2 so the (batch, row-block) grid has 4 steps.
    B, Cin, Cmid, H, W = 2, 8, 16, 16, 16
    det = SPDetector(in_channels=Cin, mid_channels=Cmid, key=k_param)

    x = jax.random.normal(k_x, (B, Cin, H, W), jnp.float32)

    # Run the Pallas kernel once directly and block on it.
    nodust = detector_head_pallas(x, det.w1, det.b1, det.w2, det.b2)
    nodust = jax.block_until_ready(nodust)
    assert nodust.shape == (B, H, W, det.reduction * det.reduction)
    assert bool(jnp.all(jnp.isfinite(nodust)))

    # Check against an independent pure-JAX reference (loose tolerance: bf16
    # MXU operands + approximate EUP reciprocal in the kernel).
    ref = _reference_head(x, det.w1, det.b1, det.w2, det.b2)
    np.testing.assert_allclose(np.asarray(nodust), np.asarray(ref),
                               rtol=5e-2, atol=2e-2)

    # Full forward (Pallas head + fused pixel-shuffle + numpy NMS). The numpy
    # post-processing assumes a single image, so feed one batch element.
    pts = det.forward(x[:1])
    if isinstance(pts, tuple):
        pts = pts[0]
    assert pts.shape[0] == 3

    print("KERNEL_OK")
</pallas_src>

<mosaic_0001>
module attributes {stable_mosaic.version = 11 : i64} {
  func.func @_detector_head_kernel(%arg0: i32, %arg1: i32, %arg2: memref<1x128x72xbf16, #tpu.memory_space<vmem>>, %arg3: memref<72x16xbf16, #tpu.memory_space<vmem>>, %arg4: memref<1x16xf32, #tpu.memory_space<vmem>>, %arg5: memref<16x65xbf16, #tpu.memory_space<vmem>>, %arg6: memref<1x65xf32, #tpu.memory_space<vmem>>, %arg7: memref<1x128x64xf32, #tpu.memory_space<vmem>>) attributes {dimension_semantics = [#tpu.dimension_semantics<parallel>, #tpu.dimension_semantics<parallel>], iteration_bounds = array<i64: 2, 2>, scalar_prefetch = 0 : i64, scratch_operands = 0 : i64, tpu.core_type = #tpu.core_type<tc>, window_params = [{transform_indices = @transform_0, window_bounds = array<i64: 1, 128, 72>}, {pipeline_mode = #tpu.pipeline_mode<synchronous>, transform_indices = @transform_1, window_bounds = array<i64: 72, 16>}, {pipeline_mode = #tpu.pipeline_mode<synchronous>, transform_indices = @transform_2, window_bounds = array<i64: 1, 16>}, {pipeline_mode = #tpu.pipeline_mode<synchronous>, transform_indices = @transform_3, window_bounds = array<i64: 16, 65>}, {pipeline_mode = #tpu.pipeline_mode<synchronous>, transform_indices = @transform_4, window_bounds = array<i64: 1, 65>}, {transform_indices = @transform_5, window_bounds = array<i64: 1, 128, 64>}]} {
    %c0 = arith.constant 0 : index
    %c0_0 = arith.constant 0 : index
    %c0_1 = arith.constant 0 : index
    %0 = vector.load %arg2[%c0, %c0_0, %c0_1] : memref<1x128x72xbf16, #tpu.memory_space<vmem>>, vector<1x128x72xbf16>
    %1 = vector.shape_cast %0 : vector<1x128x72xbf16> to vector<128x72xbf16>
    %c0_2 = arith.constant 0 : index
    %c0_3 = arith.constant 0 : index
    %2 = vector.load %arg3[%c0_2, %c0_3] : memref<72x16xbf16, #tpu.memory_space<vmem>>, vector<72x16xbf16>
    %cst = arith.constant dense<0.000000e+00> : vector<128x16xf32>
    %3 = tpu.matmul %1, %2, %cst {dimension_numbers = #tpu.dot_dimension_numbers<[1], [0], [0], [1], [0, 0, 1, 1], [], []>} : vector<128x72xbf16>, vector<72x16xbf16>, vector<128x16xf32> -> vector<128x16xf32>
    %c0_4 = arith.constant 0 : index
    %c0_5 = arith.constant 0 : index
    %4 = vector.load %arg4[%c0_4, %c0_5] : memref<1x16xf32, #tpu.memory_space<vmem>>, vector<1x16xf32>
    %5 = vector.shape_cast %4 : vector<1x16xf32> to vector<16xf32>
    %6 = vector.shape_cast %5 : vector<16xf32> to vector<1x16xf32>
    %7 = vector.broadcast %6 : vector<1x16xf32> to vector<128x16xf32>
    %8 = arith.addf %3, %7 : vector<128x16xf32>
    %cst_6 = arith.constant 0.000000e+00 : f32
    %9 = vector.broadcast %cst_6 : f32 to vector<128x16xf32>
    %10 = arith.maximumf %8, %9 : vector<128x16xf32>
    %11 = arith.truncf %10 : vector<128x16xf32> to vector<128x16xbf16>
    %c0_7 = arith.constant 0 : index
    %c0_8 = arith.constant 0 : index
    %12 = vector.load %arg5[%c0_7, %c0_8] : memref<16x65xbf16, #tpu.memory_space<vmem>>, vector<16x65xbf16>
    %cst_9 = arith.constant dense<0.000000e+00> : vector<128x65xf32>
    %13 = tpu.matmul %11, %12, %cst_9 {dimension_numbers = #tpu.dot_dimension_numbers<[1], [0], [0], [1], [0, 0, 1, 1], [], []>} : vector<128x16xbf16>, vector<16x65xbf16>, vector<128x65xf32> -> vector<128x65xf32>
    %c0_10 = arith.constant 0 : index
    %c0_11 = arith.constant 0 : index
    %14 = vector.load %arg6[%c0_10, %c0_11] : memref<1x65xf32, #tpu.memory_space<vmem>>, vector<1x65xf32>
    %15 = vector.shape_cast %14 : vector<1x65xf32> to vector<65xf32>
    %16 = vector.shape_cast %15 : vector<65xf32> to vector<1x65xf32>
    %17 = vector.broadcast %16 : vector<1x65xf32> to vector<128x65xf32>
    %18 = arith.addf %13, %17 : vector<128x65xf32>
    %cst_12 = arith.constant dense<0xFF800000> : vector<128xf32>
    %19 = vector.multi_reduction <maximumf>, %18, %cst_12 [1] : vector<128x65xf32> to vector<128xf32>
    %20 = vector.shape_cast %19 : vector<128xf32> to vector<128x1xf32>
    %21 = vector.broadcast %20 : vector<128x1xf32> to vector<128x65xf32>
    %22 = arith.subf %18, %21 : vector<128x65xf32>
    %23 = math.exp %22 : vector<128x65xf32>
    %cst_13 = arith.constant dense<0.000000e+00> : vector<128xf32>
    %24 = vector.multi_reduction <add>, %23, %cst_13 [1] : vector<128x65xf32> to vector<128xf32>
    %25 = vector.shape_cast %24 : vector<128xf32> to vector<128x1xf32>
    %26 = tpu.reciprocal %25 {approx = true} : vector<128x1xf32> -> vector<128x1xf32>
    %27 = vector.extract_strided_slice %23 {offsets = [0, 0], sizes = [128, 64], strides = [1, 1]} : vector<128x65xf32> to vector<128x64xf32>
    %28 = vector.broadcast %26 : vector<128x1xf32> to vector<128x64xf32>
    %29 = arith.mulf %27, %28 : vector<128x64xf32>
    %c0_14 = arith.constant 0 : index
    %c0_15 = arith.constant 0 : index
    %c0_16 = arith.constant 0 : index
    %30 = vector.load %arg7[%c0_14, %c0_15, %c0_16] : memref<1x128x64xf32, #tpu.memory_space<vmem>>, vector<1x128x64xf32>
    %31 = vector.shape_cast %30 : vector<1x128x64xf32> to vector<128x64xf32>
    %32 = vector.shape_cast %29 : vector<128x64xf32> to vector<1x128x64xf32>
    tpu.vector_store %arg7[%c0_14, %c0_15, %c0_16], %32 {strides = array<i32>} : memref<1x128x64xf32, #tpu.memory_space<vmem>>, vector<1x128x64xf32>,
    return
  }
  func.func @transform_0(%arg0: i32, %arg1: i32) -> (i32, i32, i32) {
    %c0_i32 = arith.constant 0 : i32
    %c0_i32_0 = arith.constant 0 : i32
    return %arg0, %arg1, %c0_i32 : i32, i32, i32
  }
  func.func @transform_1(%arg0: i32, %arg1: i32) -> (i32, i32) {
    %c0_i32 = arith.constant 0 : i32
    %c0_i32_0 = arith.constant 0 : i32
    %c0_i32_1 = arith.constant 0 : i32
    return %c0_i32, %c0_i32_0 : i32, i32
  }
  func.func @transform_2(%arg0: i32, %arg1: i32) -> (i32, i32) {
    %c0_i32 = arith.constant 0 : i32
    %c0_i32_0 = arith.constant 0 : i32
    %c0_i32_1 = arith.constant 0 : i32
    return %c0_i32, %c0_i32_0 : i32, i32
  }
  func.func @transform_3(%arg0: i32, %arg1: i32) -> (i32, i32) {
    %c0_i32 = arith.constant 0 : i32
    %c0_i32_0 = arith.constant 0 : i32
    %c0_i32_1 = arith.constant 0 : i32
    return %c0_i32, %c0_i32_0 : i32, i32
  }
  func.func @transform_4(%arg0: i32, %arg1: i32) -> (i32, i32) {
    %c0_i32 = arith.constant 0 : i32
    %c0_i32_0 = arith.constant 0 : i32
    %c0_i32_1 = arith.constant 0 : i32
    return %c0_i32, %c0_i32_0 : i32, i32
  }
  func.func @transform_5(%arg0: i32, %arg1: i32) -> (i32, i32, i32) {
    %c0_i32 = arith.constant 0 : i32
    %c0_i32_0 = arith.constant 0 : i32
    return %arg0, %arg1, %c0_i32 : i32, i32, i32
  }
}

</mosaic_0001>

<llo_original>
// kernel: tpu_custom_call.1
$region0: #{tpu_custom_call.1}
  #allocation0 [shape = 'u32[]', space=smem, size = 0x4, offset = 0x4, fixed_abs, tag = 'smem constant byte address 0x4 - core index']
  #allocation1 [shape = 'u32[144,128]{1,0:T(1,128)}', space=vmem, size = 0x12000, scoped, tag = 'internal scratch']
  %s0 = inlined_call_operand.vmem [shape: bf16[2,256,72], index: 0, kind: input, shape index: {}]
  %s1 = inlined_call_operand.vmem [shape: bf16[72,16], index: 1, kind: input, shape index: {}]
  %s2 = inlined_call_operand.vmem [shape: f32[1,16], index: 2, kind: input, shape index: {}]
  %s3 = inlined_call_operand.vmem [shape: bf16[16,65], index: 3, kind: input, shape index: {}]
  %s4 = inlined_call_operand.vmem [shape: f32[1,65], index: 4, kind: input, shape index: {}]
  %s5 = inlined_call_operand.vmem [shape: f32[2,256,64], index: 5, kind: output, shape index: {}]
  %s6 = sld [smem:[#allocation0]]
  $region53: #{tpu_custom_call.1} parent=0
    _
  %s8 = ssub.s32 1, %s6
  %s9 = scalar_select 0, %s8, %s6
  loop: start=0, step=1, limit=6
  $region2: #{tpu_custom_call.1} parent=0 // loop_pre_header
    _
  $region3: #{tpu_custom_call.1} parent=0 // loop_header
    %s11 = sphi 0, %s15
    %p12 = scmp.ge.s32.totalorder %s11, 6
    %s18 = sphi 0, %s30
    %s19 = sphi 0, %s26
    %s20 = sphi 0, %s18
    %s21 = sphi 0, %s19
    %s22 = sphi 0, %s20
    %s23 = sphi 0, %s21
    %s35 = sphi 0, %s37
    %s38 = sphi 0, %s35
    %s39 = sphi 0, %s38
    %s55 = sphi 0, %s39
    %s59 = sphi 0, %s59
    %s61 = sphi 0, %s59
    %s62 = sphi 0, %s61
    %s76 = sphi 0, %s62
    %s80 = sphi 0, %s80
    %s82 = sphi 0, %s80
    %s83 = sphi 0, %s82
    %s97 = sphi 0, %s83
    %s101 = sphi 0, %s101
    %s103 = sphi 0, %s101
    %s104 = sphi 0, %s103
    %s118 = sphi 0, %s104
    %s122 = sphi 0, %s122
    %s124 = sphi 0, %s122
    %s125 = sphi 0, %s124
    %s139 = sphi 0, %s125
    %s147 = sphi 0, %s149
    %s150 = sphi 0, %s147
    %s151 = sphi 0, %s150
    %s167 = sphi 0, %s151
  $region4: #{tpu_custom_call.1} parent=0 // loop_header_branch
    %14 = sbr.rel (%p12) target = $region8
  $region5: #{tpu_custom_call.1} parent=0 // loop_body
    %s16 = ssub.s32 %s11, 1
    %s17 = ssub.s32 %s11, 2
    %s24 = sadd.s32 1, %s19
    %p25 = scmp.ge.s32.totalorder %s24, 2
    %s26 = scalar_select %p25, 0, %s24
    %s27 = sadd.s32 1, %s18
    %s28 = scalar_select %p25, %s27, %s18
    %p29 = scmp.ge.s32.totalorder %s28, 2
    %s30 = scalar_select %p29, 0, %s28
    %s31 = ssub.s32 %s18, %s30
    %s32 = ssub.s32 %s19, %s26
    %s33 = sor.u32 %s31, %s32
    %p34 = scmp.eq.s32.totalorder %s33, 0
    %s36 = sadd.s32 %s35, 1
    %s37 = scalar_select %p34, %s35, %s36
    %p40 = pneg %p34
    %p41 = scmp.eq.s32.totalorder %s11, 3
    %p42 = por %p40, %p41
    %p43 = scmp.ne.s32.totalorder %s35, %s38
    %p44 = scmp.eq.s32.totalorder %s11, 0
    %p45 = por %p43, %p44
    %p46 = scmp.ne.s32.totalorder %s35, %s38
    %p47 = scmp.eq.s32.totalorder %s16, 3
    %p48 = por %p46, %p47
    %p49 = scmp.ne.s32.totalorder %s38, %s39
    %p50 = scmp.eq.s32.totalorder %s16, 0
    %p51 = por %p49, %p50
    %p52 = scmp.ne.s32.totalorder %s38, %s39
    %p53 = scmp.eq.s32.totalorder %s17, 3
    %p54 = por %p52, %p53
    %p56 = scmp.ne.s32.totalorder %s39, %s55
    %p57 = scmp.eq.s32.totalorder %s17, 0
    %p58 = por %p56, %p57
    %s60 = sadd.s32 %s59, 1
    %p63 = scmp.eq.s32.totalorder %s11, 3
    %p64 = scmp.ne.s32.totalorder %s59, %s61
    %p65 = scmp.eq.s32.totalorder %s11, 0
    %p66 = por %p64, %p65
    %p67 = scmp.ne.s32.totalorder %s59, %s61
    %p68 = scmp.eq.s32.totalorder %s16, 3
    %p69 = por %p67, %p68
    %p70 = scmp.ne.s32.totalorder %s61, %s62
    %p71 = scmp.eq.s32.totalorder %s16, 0
    %p72 = por %p70, %p71
    %p73 = scmp.ne.s32.totalorder %s61, %s62
    %p74 = scmp.eq.s32.totalorder %s17, 3
    %p75 = por %p73, %p74
    %p77 = scmp.ne.s32.totalorder %s62, %s76
    %p78 = scmp.eq.s32.totalorder %s17, 0
    %p79 = por %p77, %p78
    %s81 = sadd.s32 %s80, 1
    %p84 = scmp.eq.s32.totalorder %s11, 3
    %p85 = scmp.ne.s32.totalorder %s80, %s82
    %p86 = scmp.eq.s32.totalorder %s11, 0
    %p87 = por %p85, %p86
    %p88 = scmp.ne.s32.totalorder %s80, %s82
    %p89 = scmp.eq.s32.totalorder %s16, 3
    %p90 = por %p88, %p89
    %p91 = scmp.ne.s32.totalorder %s82, %s83
    %p92 = scmp.eq.s32.totalorder %s16, 0
    %p93 = por %p91, %p92
    %p94 = scmp.ne.s32.totalorder %s82, %s83
    %p95 = scmp.eq.s32.totalorder %s17, 3
    %p96 = por %p94, %p95
    %p98 = scmp.ne.s32.totalorder %s83, %s97
    %p99 = scmp.eq.s32.totalorder %s17, 0
    %p100 = por %p98, %p99
    %s102 = sadd.s32 %s101, 1
    %p105 = scmp.eq.s32.totalorder %s11, 3
    %p106 = scmp.ne.s32.totalorder %s101, %s103
    %p107 = scmp.eq.s32.totalorder %s11, 0
    %p108 = por %p106, %p107
    %p109 = scmp.ne.s32.totalorder %s101, %s103
    %p110 = scmp.eq.s32.totalorder %s16, 3
    %p111 = por %p109, %p110
    %p112 = scmp.ne.s32.totalorder %s103, %s104
    %p113 = scmp.eq.s32.totalorder %s16, 0
    %p114 = por %p112, %p113
    %p115 = scmp.ne.s32.totalorder %s103, %s104
    %p116 = scmp.eq.s32.totalorder %s17, 3
    %p117 = por %p115, %p116
    %p119 = scmp.ne.s32.totalorder %s104, %s118
    %p120 = scmp.eq.s32.totalorder %s17, 0
    %p121 = por %p119, %p120
    %s123 = sadd.s32 %s122, 1
    %p126 = scmp.eq.s32.totalorder %s11, 3
    %p127 = scmp.ne.s32.totalorder %s122, %s124
    %p128 = scmp.eq.s32.totalorder %s11, 0
    %p129 = por %p127, %p128
    %p130 = scmp.ne.s32.totalorder %s122, %s124
    %p131 = scmp.eq.s32.totalorder %s16, 3
    %p132 = por %p130, %p131
    %p133 = scmp.ne.s32.totalorder %s124, %s125
    %p134 = scmp.eq.s32.totalorder %s16, 0
    %p135 = por %p133, %p134
    %p136 = scmp.ne.s32.totalorder %s124, %s125
    %p137 = scmp.eq.s32.totalorder %s17, 3
    %p138 = por %p136, %p137
    %p140 = scmp.ne.s32.totalorder %s125, %s139
    %p141 = scmp.eq.s32.totalorder %s17, 0
    %p142 = por %p140, %p141
    %s143 = ssub.s32 %s18, %s30
    %s144 = ssub.s32 %s19, %s26
    %s145 = sor.u32 %s143, %s144
    %p146 = scmp.eq.s32.totalorder %s145, 0
    %s148 = sadd.s32 %s147, 1
    %s149 = scalar_select %p146, %s147, %s148
    %p152 = pneg %p146
    %p153 = scmp.eq.s32.totalorder %s11, 3
    %p154 = por %p152, %p153
    %p155 = scmp.ne.s32.totalorder %s147, %s150
    %p156 = scmp.eq.s32.totalorder %s11, 0
    %p157 = por %p155, %p156
    %p158 = scmp.ne.s32.totalorder %s147, %s150
    %p159 = scmp.eq.s32.totalorder %s16, 3
    %p160 = por %p158, %p159
    %p161 = scmp.ne.s32.totalorder %s150, %s151
    %p162 = scmp.eq.s32.totalorder %s16, 0
    %p163 = por %p161, %p162
    %p164 = scmp.ne.s32.totalorder %s150, %s151
    %p165 = scmp.eq.s32.totalorder %s17, 3
    %p166 = por %p164, %p165
    %p168 = scmp.ne.s32.totalorder %s151, %s167
    %p169 = scmp.eq.s32.totalorder %s17, 0
    %p170 = por %p168, %p169
    %p171 = scmp.le.s32.totalorder 1, %s11
    %p172 = scmp.lt.s32.totalorder %s11, 5
    %p173 = pnand %p171, %p172
    %p174 = pneg %p173
    // Predicated region
    $region9: #{tpu_custom_call.1} parent=5 // pred_check
      _
    $region10: #{tpu_custom_call.1} parent=5 // pred_check_branch
      %176 = sbr.rel (%p173) target = $region12
    $region11: #{tpu_custom_call.1} parent=5 // pred_region
      %s177 = ssub.s32 %s11, 1
      // Predicated region
      $region13: #{tpu_custom_call.1} parent=11 // pred_check
        %p178 = pneg %p72
      $region14: #{tpu_custom_call.1} parent=11 // pred_check_branch
        %180 = sbr.rel (%p178) target = $region16
      $region15: #{tpu_custom_call.1} parent=11 // pred_region
        _
      $region16: #{tpu_custom_call.1} parent=11 // pred_fallthru
        _
      // Predicated region
      $region17: #{tpu_custom_call.1} parent=11 // pred_check
        %p181 = pneg %p93
      $region18: #{tpu_custom_call.1} parent=11 // pred_check_branch
        %183 = sbr.rel (%p181) target = $region20
      $region19: #{tpu_custom_call.1} parent=11 // pred_region
        _
      $region20: #{tpu_custom_call.1} parent=11 // pred_fallthru
        _
      // Predicated region
      $region21: #{tpu_custom_call.1} parent=11 // pred_check
        %p184 = pneg %p114
      $region22: #{tpu_custom_call.1} parent=11 // pred_check_branch
        %186 = sbr.rel (%p184) target = $region24
      $region23: #{tpu_custom_call.1} parent=11 // pred_region
        _
      $region24: #{tpu_custom_call.1} parent=11 // pred_fallthru
        _
      // Predicated region
      $region25: #{tpu_custom_call.1} parent=11 // pred_check
        %p187 = pneg %p135
      $region26: #{tpu_custom_call.1} parent=11 // pred_check_branch
        %189 = sbr.rel (%p187) target = $region28
      $region27: #{tpu_custom_call.1} parent=11 // pred_region
        _
      $region28: #{tpu_custom_call.1} parent=11 // pred_fallthru
        _
    $region12: #{tpu_custom_call.1} parent=5 // pred_fallthru
      _
    %p190 = scmp.lt.s32.totalorder %s11, 4
    // Predicated region
    $region29: #{tpu_custom_call.1} parent=5 // pred_check
      %p191 = pneg %p190
    $region30: #{tpu_custom_call.1} parent=5 // pred_check_branch
      %193 = sbr.rel (%p191) target = $region32
    $region31: #{tpu_custom_call.1} parent=5 // pred_region
      // Predicated region
      $region33: #{tpu_custom_call.1} parent=31 // pred_check
        %p194 = pneg %p45
      $region34: #{tpu_custom_call.1} parent=31 // pred_check_branch
        %196 = sbr.rel (%p194) target = $region36
      $region35: #{tpu_custom_call.1} parent=31 // pred_region
        %s197 = smul.u32 16, %s19
        %p198 = scmp.lt.s32.totalorder %s18, 1
        %s199 = scalar_select %p198, %s18, 1
        %p200 = scmp.lt.s32.totalorder %s197, 31
        %s201 = scalar_select %p200, %s197, 31
        %s202 = smul.addr %s199, 32
        %s203 = sadd.s32 %s201, %s202
        %s204 = smul.addr %s203, 4
        %s205 = scalar_lea.vmem %s0, %s204
        %s206 = smul.u32 16, %s19
      $region36: #{tpu_custom_call.1} parent=31 // pred_fallthru
        _
    $region32: #{tpu_custom_call.1} parent=5 // pred_fallthru
      _
    %p207 = scmp.le.s32.totalorder 1, %s11
    %p208 = scmp.lt.s32.totalorder %s11, 5
    %p209 = pnand %p207, %p208
    %p210 = pneg %p209
    // Predicated region
    $region37: #{tpu_custom_call.1} parent=5 // pred_check
      _
    $region38: #{tpu_custom_call.1} parent=5 // pred_check_branch
      %212 = sbr.rel (%p209) target = $region40
    $region39: #{tpu_custom_call.1} parent=5 // pred_region
      %s213 = ssub.s32 %s11, 1
      %s214 = smul.u32 16, %s21
      %p215 = scmp.lt.s32.totalorder %s20, 1
      %s216 = scalar_select %p215, %s20, 1
      %p217 = scmp.lt.s32.totalorder %s214, 31
      %s218 = scalar_select %p217, %s214, 31
      %s219 = smul.addr %s216, 32
      %s220 = sadd.s32 %s218, %s219
      %s221 = smul.addr %s220, 4
      %s222 = scalar_lea.vmem %s0, %s221
      %p223 = pneg %p51
      %p224 = pneg %p48
      %p225 = pneg %p72
      %p226 = pneg %p69
      %p227 = pneg %p93
      %p228 = pneg %p90
      %p229 = pneg %p114
      %p230 = pneg %p111
      %p231 = pneg %p135
      %p232 = pneg %p132
      %p233 = pneg %p163
      %p234 = pneg %p160
      %s235 = smul.u32 16, %s21
      %p236 = scmp.lt.s32.totalorder %s20, 1
      %s237 = scalar_select %p236, %s20, 1
      %p238 = scmp.lt.s32.totalorder %s235, 31
      %s239 = scalar_select %p238, %s235, 31
      %s240 = smul.addr %s237, 32
      %s241 = sadd.s32 %s239, %s240
      %s242 = smul.addr %s241, 8
      %s243 = scalar_lea.vmem %s5, %s242
      %s244 = smul.u32 16, %s21
      %p245 = scmp.lt.s32.totalorder %s20, 1
      %s246 = scalar_select %p245, %s20, 1
      %p247 = scmp.lt.s32.totalorder %s244, 31
      %s248 = scalar_select %p247, %s244, 31
      %s249 = smul.addr %s246, 32
      %s250 = sadd.s32 %s248, %s249
      %s251 = smul.addr %s250, 4
      %s252 = scalar_lea.vmem %s0, %s251
      %s253 = smul.u32 16, %s21
      %s254 = smul.u32 16, %s21
      %p255 = scmp.lt.s32.totalorder %s20, 1
      %s256 = scalar_select %p255, %s20, 1
      %p257 = scmp.lt.s32.totalorder %s254, 31
      %s258 = scalar_select %p257, %s254, 31
      %s259 = smul.addr %s256, 32
      %s260 = sadd.s32 %s258, %s259
      %s261 = smul.addr %s260, 8
      %s262 = scalar_lea.vmem %s5, %s261
      %s263 = smul.u32 16, %s21
      %v265 = vld [vmem:[%s252] sm:$0xf]
      %v266 = vld [vmem:[%s252 + $0x4] sm:$0xf]
      %v267 = vld [vmem:[%s252 + $0x8] sm:$0xf]
      %v268 = vld [vmem:[%s252 + $0xc] sm:$0xf]
      %v269 = vld [vmem:[%s252 + $0x10] sm:$0xf]
      %v270 = vld [vmem:[%s252 + $0x14] sm:$0xf]
      %v271 = vld [vmem:[%s252 + $0x18] sm:$0xf]
      %v272 = vld [vmem:[%s252 + $0x1c] sm:$0xf]
      %v273 = vld [vmem:[%s252 + $0x20] sm:$0xf]
      %v274 = vld [vmem:[%s252 + $0x24] sm:$0xf]
      %v275 = vld [vmem:[%s252 + $0x28] sm:$0xf]
      %v276 = vld [vmem:[%s252 + $0x2c] sm:$0xf]
      %v277 = vld [vmem:[%s252 + $0x30] sm:$0xf]
      %v278 = vld [vmem:[%s252 + $0x34] sm:$0xf]
      %v279 = vld [vmem:[%s252 + $0x38] sm:$0xf]
      %v280 = vld [vmem:[%s252 + $0x3c] sm:$0xf]
      %v281 = vld [vmem:[%s1] sm:$0xf]
      %v282 = vld [vmem:[%s1 + $0x4] sm:$0xf]
      %v283 = vld [vmem:[%s1 + $0x8] sm:$0xf]
      %v284 = vld [vmem:[%s1 + $0xc] sm:$0xf]
      %v285 = vld [vmem:[%s1 + $0x10] sm:$0xf]
      %v286 = vld [vmem:[%s1 + $0x14] sm:$0xf]
      %v287 = vld [vmem:[%s1 + $0x18] sm:$0xf]
      %v288 = vld [vmem:[%s1 + $0x1c] sm:$0xf]
      %v289 = vld [vmem:[%s1 + $0x20] sm:$0xf]
      %v290 = vld [vmem:[%s2] sm:$0x1]
      %v292 = vlaneseq
      %v293 = vshrl.u32 %v292, 7
      %v294 = vsub.s32 0, %v293
      %v295 = vrot.slane %v290, %v294
      %v313 = vunpack.c.l.b16 %v265
      %v314 = vunpack.c.l.b16 %v266
      %v315 = vunpack.c.l.b16 %v267
      %v316 = vunpack.c.l.b16 %v268
      %v317 = vunpack.c.l.b16 %v269
      %v318 = vunpack.c.l.b16 %v270
      %v319 = vunpack.c.l.b16 %v271
      %v320 = vunpack.c.l.b16 %v272
      %v321 = vunpack.c.l.b16 %v273
      %v322 = vunpack.c.l.b16 %v274
      %v323 = vunpack.c.l.b16 %v275
      %v324 = vunpack.c.l.b16 %v276
      %v325 = vunpack.c.l.b16 %v277
      %v326 = vunpack.c.l.b16 %v278
      %v327 = vunpack.c.l.b16 %v279
      %v328 = vunpack.c.l.b16 %v280
      %v329 = vpack.c.b16 %v314, %v313
      %v330 = vpack.c.b16 %v316, %v315
      %v331 = vpack.c.b16 %v318, %v317
      %v332 = vpack.c.b16 %v320, %v319
      %v333 = vpack.c.b16 %v322, %v321
      %v334 = vpack.c.b16 %v324, %v323
      %v335 = vpack.c.b16 %v326, %v325
      %v336 = vpack.c.b16 %v328, %v327
      %v346 = vunpack.c.l.b16 %v281
      %v347 = vunpack.c.l.b16 %v282
      %v348 = vunpack.c.l.b16 %v283
      %v349 = vunpack.c.l.b16 %v284
      %v350 = vunpack.c.l.b16 %v285
      %v351 = vunpack.c.l.b16 %v286
      %v352 = vunpack.c.l.b16 %v287
      %v353 = vunpack.c.l.b16 %v288
      %v354 = vunpack.c.l.b16 %v289
      %v355 = vpack.c.b16 %v347, %v346
      %v356 = vpack.c.b16 %v349, %v348
      %v357 = vpack.c.b16 %v351, %v350
      %v358 = vpack.c.b16 %v353, %v352
      %v359 = vpack.c.b16 %v354, %v354
      %vm364 = vcmask 588800
      %v366 = vsel %vm364, %v329, 0
      %v369 = vsel %vm364, %v330, 0
      %v372 = vsel %vm364, %v331, 0
      %v375 = vsel %vm364, %v332, 0
      %v378 = vsel %vm364, %v333, 0
      %v381 = vsel %vm364, %v334, 0
      %v384 = vsel %vm364, %v335, 0
      %v387 = vsel %vm364, %v336, 0
      %vm389 = vcmask 1043456
      %v391 = vsel %vm389, %v359, 0
      %393 = vmatprep.subr.bf16.mxu0 0
      %394 = vmatpush1.bf16.msra.mxu0 0
      %395 = vmatprep.subr.bf16.mxu0 0
      %396 = vmatpush1.bf16.msra.mxu0 0
      %397 = vmatprep.subr.bf16.mxu0 0
      %398 = vmatpush1.bf16.msra.mxu0 0
      %399 = vmatprep.subr.bf16.mxu0 0
      %400 = vmatpush1.bf16.msra.mxu0 %v391
      %401 = vmatprep.subr.bf16.mxu0 0
      %402 = vmatpush1.bf16.msra.mxu0 %v358
      %403 = vmatprep.subr.bf16.mxu0 0
      %404 = vmatpush1.bf16.msra.mxu0 %v357
      %405 = vmatprep.subr.bf16.mxu0 0
      %406 = vmatpush1.bf16.msra.mxu0 %v356
      %407 = vmatprep.subr.bf16.mxu0 0
      %408 = vmatpush1.bf16.msra.mxu0 %v355
      %409 = vmatprep.subr.bf16.mxu0 0
      %410 = vmatpush2.bf16.msra.mxu0 0
      %411 = vmatprep.subr.bf16.mxu0 0
      %412 = vmatpush2.bf16.msra.mxu0 0
      %413 = vmatprep.subr.bf16.mxu0 0
      %414 = vmatpush2.bf16.msra.mxu0 0
      %415 = vmatprep.subr.bf16.mxu0 0
      %416 = vmatpush2.bf16.msra.mxu0 0
      %417 = vmatprep.subr.bf16.mxu0 0
      %418 = vmatpush2.bf16.msra.mxu0 0
      %419 = vmatprep.subr.bf16.mxu0 0
      %420 = vmatpush2.bf16.msra.mxu0 0
      %421 = vmatprep.subr.bf16.mxu0 0
      %422 = vmatpush2.bf16.msra.mxu0 0
      %423 = vmatprep.subr.bf16.mxu0 0
      %424 = vmatpush2.bf16.msra.mxu0 0
      %425 = vmatprep.mubr.bf16.mxu0 0
      %426 = vmatmul.mubr.bf16.gmra.mxu0 %v366
      %v427 = vpop.f32.mrf.mxu0
      %v428 = vadd.f32 %v295, %v427
      %v429 = vpop.f32.mrf.mxu0
      %v430 = vpop.f32.mrf.mxu0
      %v431 = vadd.f32 %v295, %v430
      %v432 = vpop.f32.mrf.mxu0
      %433 = vmatprep.mubr.bf16.mxu0 0
      %434 = vmatmul.mubr.bf16.gmra.mxu0 %v369
      %v435 = vpop.f32.mrf.mxu0
      %v436 = vadd.f32 %v295, %v435
      %v437 = vpop.f32.mrf.mxu0
      %v438 = vpop.f32.mrf.mxu0
      %v439 = vadd.f32 %v295, %v438
      %v440 = vpop.f32.mrf.mxu0
      %441 = vmatprep.mubr.bf16.mxu0 0
      %442 = vmatmul.mubr.bf16.gmra.mxu0 %v372
      %v443 = vpop.f32.mrf.mxu0
      %v444 = vadd.f32 %v295, %v443
      %v445 = vpop.f32.mrf.mxu0
      %v446 = vpop.f32.mrf.mxu0
      %v447 = vadd.f32 %v295, %v446
      %v448 = vpop.f32.mrf.mxu0
      %449 = vmatprep.mubr.bf16.mxu0 0
      %450 = vmatmul.mubr.bf16.gmra.mxu0 %v375
      %v451 = vpop.f32.mrf.mxu0
      %v452 = vadd.f32 %v295, %v451
      %v453 = vpop.f32.mrf.mxu0
      %v454 = vpop.f32.mrf.mxu0
      %v455 = vadd.f32 %v295, %v454
      %v456 = vpop.f32.mrf.mxu0
      %457 = vmatprep.mubr.bf16.mxu0 0
      %458 = vmatmul.mubr.bf16.gmra.mxu0 %v378
      %v459 = vpop.f32.mrf.mxu0
      %v460 = vadd.f32 %v295, %v459
      %v461 = vpop.f32.mrf.mxu0
      %v462 = vpop.f32.mrf.mxu0
      %v463 = vadd.f32 %v295, %v462
      %v464 = vpop.f32.mrf.mxu0
      %465 = vmatprep.mubr.bf16.mxu0 0
      %466 = vmatmul.mubr.bf16.gmra.mxu0 %v381
      %v467 = vpop.f32.mrf.mxu0
      %v468 = vadd.f32 %v295, %v467
      %v469 = vpop.f32.mrf.mxu0
      %v470 = vpop.f32.mrf.mxu0
      %v471 = vadd.f32 %v295, %v470
      %v472 = vpop.f32.mrf.mxu0
      %473 = vmatprep.mubr.bf16.mxu0 0
      %474 = vmatmul.mubr.bf16.gmra.mxu0 %v384
      %v475 = vpop.f32.mrf.mxu0
      %v476 = vadd.f32 %v295, %v475
      %v477 = vpop.f32.mrf.mxu0
      %v478 = vpop.f32.mrf.mxu0
      %v479 = vadd.f32 %v295, %v478
      %v480 = vpop.f32.mrf.mxu0
      %481 = vmatprep.mubr.bf16.mxu0 0
      %482 = vmatmul.mubr.bf16.gmra.mxu0 %v387
      %v483 = vpop.f32.mrf.mxu0
      %v484 = vadd.f32 %v295, %v483
      %v485 = vpop.f32.mrf.mxu0
      %v486 = vpop.f32.mrf.mxu0
      %v487 = vadd.f32 %v295, %v486
      %v488 = vpop.f32.mrf.mxu0
      %489 = vdwg.mxu0
      %v490 = vmax.f32 %v428, 0.0
      %v491 = vmax.f32 %v431, 0.0
      %v492 = vmax.f32 %v436, 0.0
      %v493 = vmax.f32 %v439, 0.0
      %v494 = vmax.f32 %v444, 0.0
      %v495 = vmax.f32 %v447, 0.0
      %v496 = vmax.f32 %v452, 0.0
      %v497 = vmax.f32 %v455, 0.0
      %v498 = vmax.f32 %v460, 0.0
      %v499 = vmax.f32 %v463, 0.0
      %v500 = vmax.f32 %v468, 0.0
      %v501 = vmax.f32 %v471, 0.0
      %v502 = vmax.f32 %v476, 0.0
      %v503 = vmax.f32 %v479, 0.0
      %v504 = vmax.f32 %v484, 0.0
      %v505 = vmax.f32 %v487, 0.0
      %v506 = vpack.c.bf16 %v491, %v490
      %v507 = vpack.c.bf16 %v493, %v492
      %v508 = vpack.c.bf16 %v495, %v494
      %v509 = vpack.c.bf16 %v497, %v496
      %v510 = vpack.c.bf16 %v499, %v498
      %v511 = vpack.c.bf16 %v501, %v500
      %v512 = vpack.c.bf16 %v503, %v502
      %v513 = vpack.c.bf16 %v505, %v504
      %v514 = vld [vmem:[%s3] sm:$0xf]
      %v515 = vld [vmem:[%s3 + $0x4] sm:$0xf]
      %v516 = vld [vmem:[%s4] sm:$0x1]
      %v518 = vlaneseq
      %v519 = vshrl.u32 %v518, 7
      %v520 = vsub.s32 0, %v519
      %v521 = vrot.slane %v516, %v520
      %v525 = vunpack.c.l.b16 %v514
      %v526 = vunpack.c.l.b16 %v515
      %v527 = vpack.c.b16 %v526, %v525
      %vm529 = vcmask 130048
      %v531 = vsel %vm529, %v506, 0
      %v534 = vsel %vm529, %v507, 0
      %v537 = vsel %vm529, %v508, 0
      %v540 = vsel %vm529, %v509, 0
      %v543 = vsel %vm529, %v510, 0
      %v546 = vsel %vm529, %v511, 0
      %v549 = vsel %vm529, %v512, 0
      %v552 = vsel %vm529, %v513, 0
      %554 = vmatprep.subr.bf16.mxu0 0
      %555 = vmatpush1.bf16.msra.mxu0 0
      %556 = vmatprep.subr.bf16.mxu0 0
      %557 = vmatpush1.bf16.msra.mxu0 0
      %558 = vmatprep.subr.bf16.mxu0 0
      %559 = vmatpush1.bf16.msra.mxu0 0
      %560 = vmatprep.subr.bf16.mxu0 0
      %561 = vmatpush1.bf16.msra.mxu0 0
      %562 = vmatprep.subr.bf16.mxu0 0
      %563 = vmatpush1.bf16.msra.mxu0 0
      %564 = vmatprep.subr.bf16.mxu0 0
      %565 = vmatpush1.bf16.msra.mxu0 0
      %566 = vmatprep.subr.bf16.mxu0 0
      %567 = vmatpush1.bf16.msra.mxu0 0
      %568 = vmatprep.subr.bf16.mxu0 0
      %569 = vmatpush1.bf16.msra.mxu0 %v527
      %570 = vmatprep.subr.bf16.mxu0 0
      %571 = vmatpush2.bf16.msra.mxu0 0
      %572 = vmatprep.subr.bf16.mxu0 0
      %573 = vmatpush2.bf16.msra.mxu0 0
      %574 = vmatprep.subr.bf16.mxu0 0
      %575 = vmatpush2.bf16.msra.mxu0 0
      %576 = vmatprep.subr.bf16.mxu0 0
      %577 = vmatpush2.bf16.msra.mxu0 0
      %578 = vmatprep.subr.bf16.mxu0 0
      %579 = vmatpush2.bf16.msra.mxu0 0
      %580 = vmatprep.subr.bf16.mxu0 0
      %581 = vmatpush2.bf16.msra.mxu0 0
      %582 = vmatprep.subr.bf16.mxu0 0
      %583 = vmatpush2.bf16.msra.mxu0 0
      %584 = vmatprep.subr.bf16.mxu0 0
      %585 = vmatpush2.bf16.msra.mxu0 0
      %586 = vmatprep.mubr.bf16.mxu0 0
      %587 = vmatmul.mubr.bf16.gmra.mxu0 %v531
      %v588 = vpop.f32.mrf.mxu0
      %v589 = vadd.f32 %v521, %v588
      %v590 = vpop.f32.mrf.mxu0
      %v591 = vpop.f32.mrf.mxu0
      %v592 = vadd.f32 %v521, %v591
      %v593 = vpop.f32.mrf.mxu0
      %594 = vmatprep.mubr.bf16.mxu0 0
      %595 = vmatmul.mubr.bf16.gmra.mxu0 %v534
      %v596 = vpop.f32.mrf.mxu0
      %v597 = vadd.f32 %v521, %v596
      %v598 = vpop.f32.mrf.mxu0
      %v599 = vpop.f32.mrf.mxu0
      %v600 = vadd.f32 %v521, %v599
      %v601 = vpop.f32.mrf.mxu0
      %602 = vmatprep.mubr.bf16.mxu0 0
      %603 = vmatmul.mubr.bf16.gmra.mxu0 %v537
      %v604 = vpop.f32.mrf.mxu0
      %v605 = vadd.f32 %v521, %v604
      %v606 = vpop.f32.mrf.mxu0
      %v607 = vpop.f32.mrf.mxu0
      %v608 = vadd.f32 %v521, %v607
      %v609 = vpop.f32.mrf.mxu0
      %610 = vmatprep.mubr.bf16.mxu0 0
      %611 = vmatmul.mubr.bf16.gmra.mxu0 %v540
      %v612 = vpop.f32.mrf.mxu0
      %v613 = vadd.f32 %v521, %v612
      %v614 = vpop.f32.mrf.mxu0
      %v615 = vpop.f32.mrf.mxu0
      %v616 = vadd.f32 %v521, %v615
      %v617 = vpop.f32.mrf.mxu0
      %618 = vmatprep.mubr.bf16.mxu0 0
      %619 = vmatmul.mubr.bf16.gmra.mxu0 %v543
      %v620 = vpop.f32.mrf.mxu0
      %v621 = vadd.f32 %v521, %v620
      %v622 = vpop.f32.mrf.mxu0
      %v623 = vpop.f32.mrf.mxu0
      %v624 = vadd.f32 %v521, %v623
      %v625 = vpop.f32.mrf.mxu0
      %626 = vmatprep.mubr.bf16.mxu0 0
      %627 = vmatmul.mubr.bf16.gmra.mxu0 %v546
      %v628 = vpop.f32.mrf.mxu0
      %v629 = vadd.f32 %v521, %v628
      %v630 = vpop.f32.mrf.mxu0
      %v631 = vpop.f32.mrf.mxu0
      %v632 = vadd.f32 %v521, %v631
      %v633 = vpop.f32.mrf.mxu0
      %634 = vmatprep.mubr.bf16.mxu0 0
      %635 = vmatmul.mubr.bf16.gmra.mxu0 %v549
      %v636 = vpop.f32.mrf.mxu0
      %v637 = vadd.f32 %v521, %v636
      %v638 = vpop.f32.mrf.mxu0
      %v639 = vpop.f32.mrf.mxu0
      %v640 = vadd.f32 %v521, %v639
      %v641 = vpop.f32.mrf.mxu0
      %642 = vmatprep.mubr.bf16.mxu0 0
      %643 = vmatmul.mubr.bf16.gmra.mxu0 %v552
      %v644 = vpop.f32.mrf.mxu0
      %v645 = vadd.f32 %v521, %v644
      %v646 = vpop.f32.mrf.mxu0
      %v647 = vpop.f32.mrf.mxu0
      %v648 = vadd.f32 %v521, %v647
      %v649 = vpop.f32.mrf.mxu0
      %650 = vdwg.mxu0
      %vm651 = vcmask 531456
      %v652 = vsel %vm651, %v589, -inf
      %653 = vmax.xlane.f32.xlu0 %v652
      %v654 = vpop.xlane.xlu0 %653
      %v655 = vsel %vm651, %v592, -inf
      %656 = vmax.xlane.f32.xlu0 %v655
      %v657 = vpop.xlane.xlu0 %656
      %v658 = vsel %vm651, %v597, -inf
      %659 = vmax.xlane.f32.xlu0 %v658
      %v660 = vpop.xlane.xlu0 %659
      %v661 = vsel %vm651, %v600, -inf
      %662 = vmax.xlane.f32.xlu0 %v661
      %v663 = vpop.xlane.xlu0 %662
      %v664 = vsel %vm651, %v605, -inf
      %665 = vmax.xlane.f32.xlu0 %v664
      %v666 = vpop.xlane.xlu0 %665
      %v667 = vsel %vm651, %v608, -inf
      %668 = vmax.xlane.f32.xlu0 %v667
      %v669 = vpop.xlane.xlu0 %668
      %v670 = vsel %vm651, %v613, -inf
      %671 = vmax.xlane.f32.xlu0 %v670
      %v672 = vpop.xlane.xlu0 %671
      %v673 = vsel %vm651, %v616, -inf
      %674 = vmax.xlane.f32.xlu0 %v673
      %v675 = vpop.xlane.xlu0 %674
      %v676 = vsel %vm651, %v621, -inf
      %677 = vmax.xlane.f32.xlu0 %v676
      %v678 = vpop.xlane.xlu0 %677
      %v679 = vsel %vm651, %v624, -inf
      %680 = vmax.xlane.f32.xlu0 %v679
      %v681 = vpop.xlane.xlu0 %680
      %v682 = vsel %vm651, %v629, -inf
      %683 = vmax.xlane.f32.xlu0 %v682
      %v684 = vpop.xlane.xlu0 %683
      %v685 = vsel %vm651, %v632, -inf
      %686 = vmax.xlane.f32.xlu0 %v685
      %v687 = vpop.xlane.xlu0 %686
      %v688 = vsel %vm651, %v637, -inf
      %689 = vmax.xlane.f32.xlu0 %v688
      %v690 = vpop.xlane.xlu0 %689
      %v691 = vsel %vm651, %v640, -inf
      %692 = vmax.xlane.f32.xlu0 %v691
      %v693 = vpop.xlane.xlu0 %692
      %v694 = vsel %vm651, %v645, -inf
      %695 = vmax.xlane.f32.xlu0 %v694
      %v696 = vpop.xlane.xlu0 %695
      %v697 = vsel %vm651, %v648, -inf
      %698 = vmax.xlane.f32.xlu0 %v697
      %v699 = vpop.xlane.xlu0 %698
      %v700 = vsub.f32 %v589, %v654
      %v701 = vsub.f32 %v592, %v657
      %v702 = vsub.f32 %v597, %v660
      %v703 = vsub.f32 %v600, %v663
      %v704 = vsub.f32 %v605, %v666
      %v705 = vsub.f32 %v608, %v669
      %v706 = vsub.f32 %v613, %v672
      %v707 = vsub.f32 %v616, %v675
      %v708 = vsub.f32 %v621, %v678
      %v709 = vsub.f32 %v624, %v681
      %v710 = vsub.f32 %v629, %v684
      %v711 = vsub.f32 %v632, %v687
      %v712 = vsub.f32 %v637, %v690
      %v713 = vsub.f32 %v640, %v693
      %v714 = vsub.f32 %v645, %v696
      %v715 = vsub.f32 %v648, %v699
      %v716 = vmul.f32 %v700, 1.442695
      %v717 = vpow.pop %v716
      %v718 = vmul.f32 %v701, 1.442695
      %v719 = vpow.pop %v718
      %v720 = vmul.f32 %v702, 1.442695
      %v721 = vpow.pop %v720
      %v722 = vmul.f32 %v703, 1.442695
      %v723 = vpow.pop %v722
      %v724 = vmul.f32 %v704, 1.442695
      %v725 = vpow.pop %v724
      %v726 = vmul.f32 %v705, 1.442695
      %v727 = vpow.pop %v726
      %v728 = vmul.f32 %v706, 1.442695
      %v729 = vpow.pop %v728
      %v730 = vmul.f32 %v707, 1.442695
      %v731 = vpow.pop %v730
      %v732 = vmul.f32 %v708, 1.442695
      %v733 = vpow.pop %v732
      %v734 = vmul.f32 %v709, 1.442695
      %v735 = vpow.pop %v734
      %v736 = vmul.f32 %v710, 1.442695
      %v737 = vpow.pop %v736
      %v738 = vmul.f32 %v711, 1.442695
      %v739 = vpow.pop %v738
      %v740 = vmul.f32 %v712, 1.442695
      %v741 = vpow.pop %v740
      %v742 = vmul.f32 %v713, 1.442695
      %v743 = vpow.pop %v742
      %v744 = vmul.f32 %v714, 1.442695
      %v745 = vpow.pop %v744
      %v746 = vmul.f32 %v715, 1.442695
      %v747 = vpow.pop %v746
      %v748 = vsel %vm651, %v717, 0.0
      %749 = vadd.xlane.f32.xlu0 %v748
      %v750 = vpop.xlane.xlu0 %749
      %v751 = vsel %vm651, %v719, 0.0
      %752 = vadd.xlane.f32.xlu0 %v751
      %v753 = vpop.xlane.xlu0 %752
      %v754 = vsel %vm651, %v721, 0.0
      %755 = vadd.xlane.f32.xlu0 %v754
      %v756 = vpop.xlane.xlu0 %755
      %v757 = vsel %vm651, %v723, 0.0
      %758 = vadd.xlane.f32.xlu0 %v757
      %v759 = vpop.xlane.xlu0 %758
      %v760 = vsel %vm651, %v725, 0.0
      %761 = vadd.xlane.f32.xlu0 %v760
      %v762 = vpop.xlane.xlu0 %761
      %v763 = vsel %vm651, %v727, 0.0
      %764 = vadd.xlane.f32.xlu0 %v763
      %v765 = vpop.xlane.xlu0 %764
      %v766 = vsel %vm651, %v729, 0.0
      %767 = vadd.xlane.f32.xlu0 %v766
      %v768 = vpop.xlane.xlu0 %767
      %v769 = vsel %vm651, %v731, 0.0
      %770 = vadd.xlane.f32.xlu0 %v769
      %v771 = vpop.xlane.xlu0 %770
      %v772 = vsel %vm651, %v733, 0.0
      %773 = vadd.xlane.f32.xlu0 %v772
      %v774 = vpop.xlane.xlu0 %773
      %v775 = vsel %vm651, %v735, 0.0
      %776 = vadd.xlane.f32.xlu0 %v775
      %v777 = vpop.xlane.xlu0 %776
      %v778 = vsel %vm651, %v737, 0.0
      %779 = vadd.xlane.f32.xlu0 %v778
      %v780 = vpop.xlane.xlu0 %779
      %v781 = vsel %vm651, %v739, 0.0
      %782 = vadd.xlane.f32.xlu0 %v781
      %v783 = vpop.xlane.xlu0 %782
      %v784 = vsel %vm651, %v741, 0.0
      %785 = vadd.xlane.f32.xlu0 %v784
      %v786 = vpop.xlane.xlu0 %785
      %v787 = vsel %vm651, %v743, 0.0
      %788 = vadd.xlane.f32.xlu0 %v787
      %v789 = vpop.xlane.xlu0 %788
      %v790 = vsel %vm651, %v745, 0.0
      %791 = vadd.xlane.f32.xlu0 %v790
      %v792 = vpop.xlane.xlu0 %791
      %v793 = vsel %vm651, %v747, 0.0
      %794 = vadd.xlane.f32.xlu0 %v793
      %v795 = vpop.xlane.xlu0 %794
      %v796 = vrcp.pop %v750
      %v797 = vrcp.pop %v753
      %v798 = vrcp.pop %v756
      %v799 = vrcp.pop %v759
      %v800 = vrcp.pop %v762
      %v801 = vrcp.pop %v765
      %v802 = vrcp.pop %v768
      %v803 = vrcp.pop %v771
      %v804 = vrcp.pop %v774
      %v805 = vrcp.pop %v777
      %v806 = vrcp.pop %v780
      %v807 = vrcp.pop %v783
      %v808 = vrcp.pop %v786
      %v809 = vrcp.pop %v789
      %v810 = vrcp.pop %v792
      %v811 = vrcp.pop %v795
      %v812 = vmul.f32 %v717, %v796
      %v813 = vmul.f32 %v719, %v797
      %v814 = vmul.f32 %v721, %v798
      %v815 = vmul.f32 %v723, %v799
      %v816 = vmul.f32 %v725, %v800
      %v817 = vmul.f32 %v727, %v801
      %v818 = vmul.f32 %v729, %v802
      %v819 = vmul.f32 %v731, %v803
      %v820 = vmul.f32 %v733, %v804
      %v821 = vmul.f32 %v735, %v805
      %v822 = vmul.f32 %v737, %v806
      %v823 = vmul.f32 %v739, %v807
      %v824 = vmul.f32 %v741, %v808
      %v825 = vmul.f32 %v743, %v809
      %v826 = vmul.f32 %v745, %v810
      %v827 = vmul.f32 %v747, %v811
      %vm828 = vcmask 523264
      %829 = vst.msk [vmem:[%s262] sm:$0xff] %vm828, %v812
      %830 = vst.msk [vmem:[%s262 + $0x8] sm:$0xff] %vm828, %v813
      %831 = vst.msk [vmem:[%s262 + $0x10] sm:$0xff] %vm828, %v814
      %832 = vst.msk [vmem:[%s262 + $0x18] sm:$0xff] %vm828, %v815
      %833 = vst.msk [vmem:[%s262 + $0x20] sm:$0xff] %vm828, %v816
      %834 = vst.msk [vmem:[%s262 + $0x28] sm:$0xff] %vm828, %v817
      %835 = vst.msk [vmem:[%s262 + $0x30] sm:$0xff] %vm828, %v818
      %836 = vst.msk [vmem:[%s262 + $0x38] sm:$0xff] %vm828, %v819
      %837 = vst.msk [vmem:[%s262 + $0x40] sm:$0xff] %vm828, %v820
      %838 = vst.msk [vmem:[%s262 + $0x48] sm:$0xff] %vm828, %v821
      %839 = vst.msk [vmem:[%s262 + $0x50] sm:$0xff] %vm828, %v822
      %840 = vst.msk [vmem:[%s262 + $0x58] sm:$0xff] %vm828, %v823
      %841 = vst.msk [vmem:[%s262 + $0x60] sm:$0xff] %vm828, %v824
      %842 = vst.msk [vmem:[%s262 + $0x68] sm:$0xff] %vm828, %v825
      %843 = vst.msk [vmem:[%s262 + $0x70] sm:$0xff] %vm828, %v826
      %844 = vst.msk [vmem:[%s262 + $0x78] sm:$0xff] %vm828, %v827
      %s845 = smul.u32 16, %s21
      %p846 = scmp.lt.s32.totalorder %s20, 1
      %s847 = scalar_select %p846, %s20, 1
      %p848 = scmp.lt.s32.totalorder %s845, 31
      %s849 = scalar_select %p848, %s845, 31
      %s850 = smul.addr %s847, 32
      %s851 = sadd.s32 %s849, %s850
      %s852 = smul.addr %s851, 8
      %s853 = scalar_lea.vmem %s5, %s852
      // Predicated region
      $region41: #{tpu_custom_call.1} parent=39 // pred_check
        %p854 = pneg %p160
      $region42: #{tpu_custom_call.1} parent=39 // pred_check_branch
        %856 = sbr.rel (%p854) target = $region44
      $region43: #{tpu_custom_call.1} parent=39 // pred_region
        %s857 = smul.u32 16, %s21
      $region44: #{tpu_custom_call.1} parent=39 // pred_fallthru
        _
    $region40: #{tpu_custom_call.1} parent=5 // pred_fallthru
      _
    %p858 = scmp.le.s32.totalorder 2, %s11
    // Predicated region
    $region45: #{tpu_custom_call.1} parent=5 // pred_check
      %p859 = pneg %p858
    $region46: #{tpu_custom_call.1} parent=5 // pred_check_branch
      %861 = sbr.rel (%p859) target = $region48
    $region47: #{tpu_custom_call.1} parent=5 // pred_region
      %s862 = ssub.s32 %s11, 2
      // Predicated region
      $region49: #{tpu_custom_call.1} parent=47 // pred_check
        %p863 = pneg %p166
      $region50: #{tpu_custom_call.1} parent=47 // pred_check_branch
        %865 = sbr.rel (%p863) target = $region52
      $region51: #{tpu_custom_call.1} parent=47 // pred_region
        %s866 = smul.u32 16, %s23
        %p867 = scmp.lt.s32.totalorder %s22, 1
        %s868 = scalar_select %p867, %s22, 1
        %p869 = scmp.lt.s32.totalorder %s866, 31
        %s870 = scalar_select %p869, %s866, 31
        %s871 = smul.addr %s868, 32
        %s872 = sadd.s32 %s870, %s871
        %s873 = smul.addr %s872, 8
        %s874 = scalar_lea.vmem %s5, %s873
      $region52: #{tpu_custom_call.1} parent=47 // pred_fallthru
        _
    $region48: #{tpu_custom_call.1} parent=5 // pred_fallthru
      _
  $region6: #{tpu_custom_call.1} parent=0 // loop_footer
    %s15 = sadd.s32 1, %s11
  $region7: #{tpu_custom_call.1} parent=0 // loop_footer_branch
    %10 = sbr.rel target = $region3
  $region8: #{tpu_custom_call.1} parent=0 // loop_exit
    _

</llo_original>
